<compile_context>
chip_gen: v7x
topology: tpu7x:2x2x1
jax: 0.10.0
libtpu: 0.0.40
codegen_flags: <defaults>
</compile_context>

<pallas_src>
import functools
import math

import jax
import jax.numpy as jnp
from jax import lax
from jax.experimental import pallas as pl
from jax.experimental.pallas import tpu as pltpu


# ----------------------------------------------------------------------------
# Fused kernel. One grid step = one (batch, head) pair:
#   QKV proj (single matmul) -> RoPE -> causal SDPA -> partial dense proj (accumulated)
# ----------------------------------------------------------------------------
def _fused_self_attention_kernel(x_ref, wqkv_ref, wd_ref, cos_ref, sin_ref, pswap_ref,
                                 out_ref, kc_ref, vc_ref, acc_ref,
                                 *, head_dim, scale):
    D = head_dim
    h = pl.program_id(1)

    x16 = x_ref[0].astype(jnp.bfloat16)                       # (S, H)
    S = x16.shape[0]

    # ---- single fused QKV projection for this head (bf16 operands, f32 acc) ----
    qkv = jnp.dot(x16, wqkv_ref[0], preferred_element_type=jnp.float32)   # (S, 3D)
    q = qkv[:, :D]
    k = qkv[:, D:2 * D]
    v = qkv[:, 2 * D:]

    # ---- RoPE:  x*cos + swap_pairs(x)*sin  (tables are (S, D); swap is a tiny (D,D)) ----
    cos = cos_ref[...]                                         # (S, D) f32
    sin = sin_ref[...]                                         # (S, D) f32, sign-interleaved
    pswap = pswap_ref[...]                                     # (D, D) bf16 constant

    def rope(t):
        t_sw = jnp.dot(t.astype(jnp.bfloat16), pswap,
                       preferred_element_type=jnp.float32)     # exact pair swap
        return t * cos + t_sw * sin

    q = rope(q)
    k = rope(k)

    # kv cache: post-RoPE K, pre-attention V, stored bf16 (halves writeback BW)
    kc_ref[0, 0] = k.astype(kc_ref.dtype)
    vc_ref[0, 0] = v.astype(vc_ref.dtype)

    # ---- causal scaled-dot-product attention (single head, (S,S) scores) ----
    q16 = (q * scale).astype(jnp.bfloat16)                     # scale folded into q
    k16 = k.astype(jnp.bfloat16)
    v16 = v.astype(jnp.bfloat16)

    s = jnp.einsum("sd,td->st", q16, k16,
                   preferred_element_type=jnp.float32)         # (S, S) f32
    row = lax.broadcasted_iota(jnp.int32, (S, S), 0)
    col = lax.broadcasted_iota(jnp.int32, (S, S), 1)
    s = jnp.where(col <= row, s, jnp.float32(-1e30))           # is_causal, NaN-safe finite
    m = jnp.max(s, axis=-1, keepdims=True)
    p = jnp.exp(s - m)
    denom = jnp.sum(p, axis=-1, keepdims=True)
    probs = p * pl.reciprocal(denom, approx=True)              # EUP slot
    ctx = jnp.dot(probs.astype(jnp.bfloat16), v16,
                  preferred_element_type=jnp.float32)          # (S, D)

    # ---- partial output projection, accumulated over heads in f32 scratch ----
    out_part = jnp.dot(ctx.astype(jnp.bfloat16), wd_ref[0],
                       preferred_element_type=jnp.float32)     # (S, H)

    @pl.when(h == 0)
    def _():
        acc_ref[...] = jnp.zeros_like(acc_ref)

    acc_ref[...] += out_part

    @pl.when(h == pl.num_programs(1) - 1)
    def _():
        out_ref[0] = acc_ref[...].astype(out_ref.dtype)


# ----------------------------------------------------------------------------
# Wrapper: one-time weight re-packing (head-major) + RoPE tables + single pallas_call
# ----------------------------------------------------------------------------
def self_attention_forward(hidden_states, rotary_pos_emb, w_qkv, w_dense,
                           *, num_heads, head_dim):
    # hidden_states: (S, B, H); rotary_pos_emb: (S, 1, rot_dim//2, 2)
    S, B, H = hidden_states.shape
    D = head_dim
    rot_dim = rotary_pos_emb.shape[-2] * 2

    # Head-major weight packing (weight-only, one-time prep), bf16 halves DMA:
    #   W_qkv: (H, NH*3D) interleaved per head  ->  (NH, H, 3D)   (q|k|v per head)
    #   W_dense: (NH*D, H)                      ->  (NH, D, H)
    w_qkv_h = w_qkv.reshape(H, num_heads, 3 * D).transpose(1, 0, 2).astype(jnp.bfloat16)
    w_dense_h = w_dense.reshape(num_heads, D, H).astype(jnp.bfloat16)

    # RoPE tables at single-head width (S, D): cos duplicated per pair, sin sign-interleaved,
    # pass-through lanes get cos=1 / sin=0.
    cos = rotary_pos_emb[:S, 0, :, 0]                                  # (S, rot/2)
    sin = rotary_pos_emb[:S, 0, :, 1]
    cos_i = jnp.repeat(cos, 2, axis=-1)                                # c0,c0,c1,c1,...
    sin_i = jnp.stack([-sin, sin], axis=-1).reshape(S, rot_dim)        # -s0,+s0,-s1,+s1
    cos_d = jnp.concatenate(
        [cos_i, jnp.ones((S, D - rot_dim), jnp.float32)], axis=-1).astype(jnp.float32)
    sin_d = jnp.concatenate(
        [sin_i, jnp.zeros((S, D - rot_dim), jnp.float32)], axis=-1).astype(jnp.float32)

    # Tiny constant (D, D) pairwise-swap operator (zero on pass-through lanes; sin=0 there).
    swap2 = jnp.array([[0.0, 1.0], [1.0, 0.0]], dtype=jnp.float32)
    pswap_rot = jnp.kron(jnp.eye(rot_dim // 2, dtype=jnp.float32), swap2)
    pswap = (jnp.zeros((D, D), jnp.float32)
             .at[:rot_dim, :rot_dim].set(pswap_rot)
             .astype(jnp.bfloat16))

    hs_bsh = hidden_states.transpose(1, 0, 2)                          # (B, S, H)

    kernel = functools.partial(_fused_self_attention_kernel,
                               head_dim=D, scale=1.0 / math.sqrt(D))

    out_b, kc_b, vc_b = pl.pallas_call(
        kernel,
        out_shape=(
            jax.ShapeDtypeStruct((B, S, H), hidden_states.dtype),
            jax.ShapeDtypeStruct((B, num_heads, S, D), jnp.bfloat16),
            jax.ShapeDtypeStruct((B, num_heads, S, D), jnp.bfloat16),
        ),
        grid=(B, num_heads),
        in_specs=[
            pl.BlockSpec((1, S, H), lambda b, h: (b, 0, 0)),          # hidden states
            pl.BlockSpec((1, H, 3 * D), lambda b, h: (h, 0, 0)),      # per-head W_qkv
            pl.BlockSpec((1, D, H), lambda b, h: (h, 0, 0)),          # per-head W_dense
            pl.BlockSpec((S, D), lambda b, h: (0, 0)),                # RoPE cos (S, D)
            pl.BlockSpec((S, D), lambda b, h: (0, 0)),                # RoPE sin (S, D)
            pl.BlockSpec((D, D), lambda b, h: (0, 0)),                # pair-swap (D, D)
        ],
        out_specs=(
            pl.BlockSpec((1, S, H), lambda b, h: (b, 0, 0)),          # accumulated over h
            pl.BlockSpec((1, 1, S, D), lambda b, h: (b, h, 0, 0)),    # K cache
            pl.BlockSpec((1, 1, S, D), lambda b, h: (b, h, 0, 0)),    # V cache
        ),
        scratch_shapes=[pltpu.VMEM((S, H), jnp.float32)],             # dense-proj accumulator
        compiler_params=pltpu.CompilerParams(
            dimension_semantics=("parallel", "arbitrary"),
            vmem_limit_bytes=32 * 1024 * 1024,
        ),
    )(hs_bsh, w_qkv_h, w_dense_h, cos_d, sin_d, pswap)

    out = out_b.transpose(1, 0, 2)                                     # (S, B, H)
    # TODO(synk): at real sizes, emit the caches directly in (S,B,NH,D) to skip this transpose.
    k_cache = kc_b.transpose(2, 0, 1, 3)                               # (S, B, NH, D) bf16
    v_cache = vc_b.transpose(2, 0, 1, 3)
    return out, (k_cache, v_cache)


# ----------------------------------------------------------------------------
# Pure-JAX reference (faithful to the PyTorch module; matmul operands in bf16
# with f32 accumulation to mirror the kernel's mixed precision)
# ----------------------------------------------------------------------------
def apply_rotary_pos_emb_ref(x, rope_cache):
    sq, b, np_, _hn = x.shape
    rot_dim = rope_cache.shape[-2] * 2
    x_rot, x_pass = x[..., :rot_dim], x[..., rot_dim:]
    rope_cache = rope_cache[:sq]
    xshaped = x_rot.reshape(sq, -1, np_, rot_dim // 2, 2)
    rope = rope_cache.reshape(sq, -1, 1, rot_dim // 2, 2)
    xr = xshaped[..., 0] * rope[..., 0] - xshaped[..., 1] * rope[..., 1]
    xi = xshaped[..., 1] * rope[..., 0] + xshaped[..., 0] * rope[..., 1]
    x_out2 = jnp.stack([xr, xi], axis=-1).reshape(sq, b, np_, rot_dim)
    return jnp.concatenate([x_out2, x_pass], axis=-1)


def reference_forward(hidden_states, rope_cache, w_qkv, w_dense, *, num_heads, head_dim):
    S, B, H = hidden_states.shape
    P = num_heads * head_dim
    bf = jnp.bfloat16
    scale = 1.0 / math.sqrt(head_dim)

    mixed = jnp.dot(hidden_states.reshape(S * B, H).astype(bf), w_qkv.astype(bf),
                    preferred_element_type=jnp.float32)
    mixed = mixed.reshape(S, B, num_heads, 3 * head_dim)
    q, k, v = jnp.split(mixed, 3, axis=-1)                 # each (S, B, NH, D)
    q = apply_rotary_pos_emb_ref(q, rope_cache)
    k = apply_rotary_pos_emb_ref(k, rope_cache)
    kv_cache = (k, v)

    qb, kb, vb = [t.transpose(1, 2, 0, 3) for t in (q, k, v)]   # (B, NH, S, D)
    s = jnp.einsum("bhqd,bhkd->bhqk", qb.astype(bf), kb.astype(bf),
                   preferred_element_type=jnp.float32) * scale
    mask = jnp.tril(jnp.ones((S, S), dtype=bool))
    s = jnp.where(mask[None, None], s, -jnp.inf)
    p = jax.nn.softmax(s, axis=-1)
    ctx = jnp.einsum("bhqk,bhkd->bhqd", p.astype(bf), vb.astype(bf),
                     preferred_element_type=jnp.float32)
    ctx = ctx.transpose(2, 0, 1, 3).reshape(S, B, P)
    out = jnp.dot(ctx.reshape(S * B, P).astype(bf), w_dense.astype(bf),
                  preferred_element_type=jnp.float32).reshape(S, B, H)
    return out, kv_cache


# ----------------------------------------------------------------------------
if __name__ == "__main__":
    # Small ChatGLM-style config (layout [seq, batch, hidden], no MQA, no biases)
    SEQ, BATCH = 8, 2
    NUM_HEADS, HEAD_DIM = 2, 32
    HIDDEN = 64
    PROJ = NUM_HEADS * HEAD_DIM                 # 64
    QKV_HIDDEN = 3 * PROJ                       # 192
    ROT_DIM = HEAD_DIM // 2                     # 16

    key = jax.random.PRNGKey(0)
    k1, k2, k3 = jax.random.split(key, 3)

    hidden_states = jax.random.normal(k1, (SEQ, BATCH, HIDDEN), dtype=jnp.float32)
    # nn.Linear weights passed transposed as (in_features, out_features)
    w_qkv = 0.05 * jax.random.normal(k2, (HIDDEN, QKV_HIDDEN), dtype=jnp.float32)
    w_dense = 0.05 * jax.random.normal(k3, (PROJ, HIDDEN), dtype=jnp.float32)

    # Rotary cache (cos, sin) pairs: (S, 1, rot_dim//2, 2)
    pos = jnp.arange(SEQ, dtype=jnp.float32)
    inv_freq = 1.0 / (10000.0 ** (jnp.arange(0, ROT_DIM, 2, dtype=jnp.float32) / ROT_DIM))
    ang = pos[:, None] * inv_freq[None, :]
    rope_cache = jnp.stack([jnp.cos(ang), jnp.sin(ang)], axis=-1)[:, None]

    out, (k_cache, v_cache) = self_attention_forward(
        hidden_states, rope_cache, w_qkv, w_dense,
        num_heads=NUM_HEADS, head_dim=HEAD_DIM)
    jax.block_until_ready(out)
    jax.block_until_ready(k_cache)
    jax.block_until_ready(v_cache)

    # sanity check against pure-JAX reference
    ref_out, (ref_k, ref_v) = reference_forward(
        hidden_states, rope_cache, w_qkv, w_dense,
        num_heads=NUM_HEADS, head_dim=HEAD_DIM)

    assert out.shape == (SEQ, BATCH, HIDDEN)
    assert k_cache.shape == (SEQ, BATCH, NUM_HEADS, HEAD_DIM)
    assert v_cache.shape == (SEQ, BATCH, NUM_HEADS, HEAD_DIM)
    # caches are stored in bf16 -> tolerance covers the quantization
    assert jnp.allclose(k_cache.astype(jnp.float32), ref_k, atol=3e-3, rtol=2e-2)
    assert jnp.allclose(v_cache.astype(jnp.float32), ref_v, atol=3e-3, rtol=2e-2)
    # out tolerance covers approx-reciprocal softmax + bf16 accumulation-order effects
    assert jnp.allclose(out, ref_out, atol=3e-3, rtol=5e-2)

    print("KERNEL_OK")
</pallas_src>

<mosaic_0001>
module attributes {stable_mosaic.version = 11 : i64} {
  func.func @_fused_self_attention_kernel(%arg0: i32, %arg1: i32, %arg2: memref<1x8x64xf32, #tpu.memory_space<vmem>>, %arg3: memref<1x64x96xbf16, #tpu.memory_space<vmem>>, %arg4: memref<1x32x64xbf16, #tpu.memory_space<vmem>>, %arg5: memref<8x32xf32, #tpu.memory_space<vmem>>, %arg6: memref<8x32xf32, #tpu.memory_space<vmem>>, %arg7: memref<32x32xbf16, #tpu.memory_space<vmem>>, %arg8: memref<1x8x64xf32, #tpu.memory_space<vmem>>, %arg9: memref<1x1x8x32xbf16, #tpu.memory_space<vmem>>, %arg10: memref<1x1x8x32xbf16, #tpu.memory_space<vmem>>, %arg11: memref<8x64xf32, #tpu.memory_space<vmem>>) attributes {dimension_semantics = [#tpu.dimension_semantics<parallel>, #tpu.dimension_semantics<arbitrary>], iteration_bounds = array<i64: 2, 2>, scalar_prefetch = 0 : i64, scratch_operands = 1 : i64, tpu.core_type = #tpu.core_type<tc>, window_params = [{transform_indices = @transform_0, window_bounds = array<i64: 1, 8, 64>}, {transform_indices = @transform_1, window_bounds = array<i64: 1, 64, 96>}, {transform_indices = @transform_2, window_bounds = array<i64: 1, 32, 64>}, {pipeline_mode = #tpu.pipeline_mode<synchronous>, transform_indices = @transform_3, window_bounds = array<i64: 8, 32>}, {pipeline_mode = #tpu.pipeline_mode<synchronous>, transform_indices = @transform_4, window_bounds = array<i64: 8, 32>}, {pipeline_mode = #tpu.pipeline_mode<synchronous>, transform_indices = @transform_5, window_bounds = array<i64: 32, 32>}, {transform_indices = @transform_6, window_bounds = array<i64: 1, 8, 64>}, {transform_indices = @transform_7, window_bounds = array<i64: 1, 1, 8, 32>}, {transform_indices = @transform_8, window_bounds = array<i64: 1, 1, 8, 32>}]} {
    %c0 = arith.constant 0 : index
    %c0_0 = arith.constant 0 : index
    %c0_1 = arith.constant 0 : index
    %0 = vector.load %arg2[%c0, %c0_0, %c0_1] : memref<1x8x64xf32, #tpu.memory_space<vmem>>, vector<1x8x64xf32>
    %1 = vector.shape_cast %0 : vector<1x8x64xf32> to vector<8x64xf32>
    %2 = arith.truncf %1 : vector<8x64xf32> to vector<8x64xbf16>
    %c0_2 = arith.constant 0 : index
    %c0_3 = arith.constant 0 : index
    %c0_4 = arith.constant 0 : index
    %3 = vector.load %arg3[%c0_2, %c0_3, %c0_4] : memref<1x64x96xbf16, #tpu.memory_space<vmem>>, vector<1x64x96xbf16>
    %4 = vector.shape_cast %3 : vector<1x64x96xbf16> to vector<64x96xbf16>
    %cst = arith.constant dense<0.000000e+00> : vector<8x96xf32>
    %5 = tpu.matmul %2, %4, %cst {dimension_numbers = #tpu.dot_dimension_numbers<[1], [0], [0], [1], [0, 0, 1, 1], [], []>} : vector<8x64xbf16>, vector<64x96xbf16>, vector<8x96xf32> -> vector<8x96xf32>
    %6 = vector.extract_strided_slice %5 {offsets = [0, 0], sizes = [8, 32], strides = [1, 1]} : vector<8x96xf32> to vector<8x32xf32>
    %7 = vector.extract_strided_slice %5 {offsets = [0, 32], sizes = [8, 32], strides = [1, 1]} : vector<8x96xf32> to vector<8x32xf32>
    %8 = vector.extract_strided_slice %5 {offsets = [0, 64], sizes = [8, 32], strides = [1, 1]} : vector<8x96xf32> to vector<8x32xf32>
    %c0_5 = arith.constant 0 : index
    %c0_6 = arith.constant 0 : index
    %9 = vector.load %arg5[%c0_5, %c0_6] : memref<8x32xf32, #tpu.memory_space<vmem>>, vector<8x32xf32>
    %c0_7 = arith.constant 0 : index
    %c0_8 = arith.constant 0 : index
    %10 = vector.load %arg6[%c0_7, %c0_8] : memref<8x32xf32, #tpu.memory_space<vmem>>, vector<8x32xf32>
    %c0_9 = arith.constant 0 : index
    %c0_10 = arith.constant 0 : index
    %11 = vector.load %arg7[%c0_9, %c0_10] : memref<32x32xbf16, #tpu.memory_space<vmem>>, vector<32x32xbf16>
    %12 = arith.truncf %6 : vector<8x32xf32> to vector<8x32xbf16>
    %cst_11 = arith.constant dense<0.000000e+00> : vector<8x32xf32>
    %13 = tpu.matmul %12, %11, %cst_11 {dimension_numbers = #tpu.dot_dimension_numbers<[1], [0], [0], [1], [0, 0, 1, 1], [], []>} : vector<8x32xbf16>, vector<32x32xbf16>, vector<8x32xf32> -> vector<8x32xf32>
    %14 = arith.mulf %6, %9 : vector<8x32xf32>
    %15 = arith.mulf %13, %10 : vector<8x32xf32>
    %16 = arith.addf %14, %15 : vector<8x32xf32>
    %17 = arith.truncf %7 : vector<8x32xf32> to vector<8x32xbf16>
    %cst_12 = arith.constant dense<0.000000e+00> : vector<8x32xf32>
    %18 = tpu.matmul %17, %11, %cst_12 {dimension_numbers = #tpu.dot_dimension_numbers<[1], [0], [0], [1], [0, 0, 1, 1], [], []>} : vector<8x32xbf16>, vector<32x32xbf16>, vector<8x32xf32> -> vector<8x32xf32>
    %19 = arith.mulf %7, %9 : vector<8x32xf32>
    %20 = arith.mulf %18, %10 : vector<8x32xf32>
    %21 = arith.addf %19, %20 : vector<8x32xf32>
    %22 = arith.truncf %21 : vector<8x32xf32> to vector<8x32xbf16>
    %c0_13 = arith.constant 0 : index
    %c0_14 = arith.constant 0 : index
    %c0_15 = arith.constant 0 : index
    %c0_16 = arith.constant 0 : index
    %23 = vector.load %arg9[%c0_13, %c0_14, %c0_15, %c0_16] : memref<1x1x8x32xbf16, #tpu.memory_space<vmem>>, vector<1x1x8x32xbf16>
    %24 = vector.shape_cast %23 : vector<1x1x8x32xbf16> to vector<8x32xbf16>
    %25 = vector.shape_cast %22 : vector<8x32xbf16> to vector<1x1x8x32xbf16>
    tpu.vector_store %arg9[%c0_13, %c0_14, %c0_15, %c0_16], %25 {strides = array<i32>} : memref<1x1x8x32xbf16, #tpu.memory_space<vmem>>, vector<1x1x8x32xbf16>,
    %26 = arith.truncf %8 : vector<8x32xf32> to vector<8x32xbf16>
    %c0_17 = arith.constant 0 : index
    %c0_18 = arith.constant 0 : index
    %c0_19 = arith.constant 0 : index
    %c0_20 = arith.constant 0 : index
    %27 = vector.load %arg10[%c0_17, %c0_18, %c0_19, %c0_20] : memref<1x1x8x32xbf16, #tpu.memory_space<vmem>>, vector<1x1x8x32xbf16>
    %28 = vector.shape_cast %27 : vector<1x1x8x32xbf16> to vector<8x32xbf16>
    %29 = vector.shape_cast %26 : vector<8x32xbf16> to vector<1x1x8x32xbf16>
    tpu.vector_store %arg10[%c0_17, %c0_18, %c0_19, %c0_20], %29 {strides = array<i32>} : memref<1x1x8x32xbf16, #tpu.memory_space<vmem>>, vector<1x1x8x32xbf16>,
    %cst_21 = arith.constant 0.176776692 : f32
    %30 = vector.broadcast %cst_21 : f32 to vector<8x32xf32>
    %31 = arith.mulf %16, %30 : vector<8x32xf32>
    %32 = arith.truncf %31 : vector<8x32xf32> to vector<8x32xbf16>
    %33 = arith.truncf %21 : vector<8x32xf32> to vector<8x32xbf16>
    %34 = arith.truncf %8 : vector<8x32xf32> to vector<8x32xbf16>
    "tpu.trace_start"() <{level = 10 : i32, message = "sd,td->st"}> : () -> ()
    %cst_22 = arith.constant dense<0.000000e+00> : vector<8x8xf32>
    %35 = tpu.matmul %32, %33, %cst_22 {dimension_numbers = #tpu.dot_dimension_numbers<[1], [1], [0], [0], [0, 0, 1, 0], [], []>} : vector<8x32xbf16>, vector<8x32xbf16>, vector<8x8xf32> -> vector<8x8xf32>
    "tpu.trace_stop"() : () -> ()
    %36 = tpu.iota {dimensions = array<i32: 0>} : vector<8x8xi32>
    %37 = tpu.iota {dimensions = array<i32: 1>} : vector<8x8xi32>
    %38 = arith.cmpi sle, %37, %36 : vector<8x8xi32>
    %cst_23 = arith.constant -1.000000e+30 : f32
    %39 = vector.broadcast %cst_23 : f32 to vector<8x8xf32>
    %40 = arith.select %38, %35, %39 : vector<8x8xi1>, vector<8x8xf32>
    %cst_24 = arith.constant dense<0xFF800000> : vector<8xf32>
    %41 = vector.multi_reduction <maximumf>, %40, %cst_24 [1] : vector<8x8xf32> to vector<8xf32>
    %42 = vector.shape_cast %41 : vector<8xf32> to vector<8x1xf32>
    %43 = vector.broadcast %42 : vector<8x1xf32> to vector<8x8xf32>
    %44 = arith.subf %40, %43 : vector<8x8xf32>
    %45 = math.exp %44 : vector<8x8xf32>
    %cst_25 = arith.constant dense<0.000000e+00> : vector<8xf32>
    %46 = vector.multi_reduction <add>, %45, %cst_25 [1] : vector<8x8xf32> to vector<8xf32>
    %47 = vector.shape_cast %46 : vector<8xf32> to vector<8x1xf32>
    %48 = tpu.reciprocal %47 {approx = true} : vector<8x1xf32> -> vector<8x1xf32>
    %49 = vector.broadcast %48 : vector<8x1xf32> to vector<8x8xf32>
    %50 = arith.mulf %45, %49 : vector<8x8xf32>
    %51 = arith.truncf %50 : vector<8x8xf32> to vector<8x8xbf16>
    %cst_26 = arith.constant dense<0.000000e+00> : vector<8x32xf32>
    %52 = tpu.matmul %51, %34, %cst_26 {dimension_numbers = #tpu.dot_dimension_numbers<[1], [0], [0], [1], [0, 0, 1, 1], [], []>} : vector<8x8xbf16>, vector<8x32xbf16>, vector<8x32xf32> -> vector<8x32xf32>
    %53 = arith.truncf %52 : vector<8x32xf32> to vector<8x32xbf16>
    %c0_27 = arith.constant 0 : index
    %c0_28 = arith.constant 0 : index
    %c0_29 = arith.constant 0 : index
    %54 = vector.load %arg4[%c0_27, %c0_28, %c0_29] : memref<1x32x64xbf16, #tpu.memory_space<vmem>>, vector<1x32x64xbf16>
    %55 = vector.shape_cast %54 : vector<1x32x64xbf16> to vector<32x64xbf16>
    %cst_30 = arith.constant dense<0.000000e+00> : vector<8x64xf32>
    %56 = tpu.matmul %53, %55, %cst_30 {dimension_numbers = #tpu.dot_dimension_numbers<[1], [0], [0], [1], [0, 0, 1, 1], [], []>} : vector<8x32xbf16>, vector<32x64xbf16>, vector<8x64xf32> -> vector<8x64xf32>
    %c0_i32 = arith.constant 0 : i32
    %57 = arith.cmpi eq, %arg1, %c0_i32 : i32
    %58 = arith.extui %57 : i1 to i32
    %c0_i32_31 = arith.constant 0 : i32
    %59 = arith.cmpi ne, %58, %c0_i32_31 : i32
    scf.if %59 {
      %cst_37 = arith.constant 0.000000e+00 : f32
      %66 = vector.broadcast %cst_37 : f32 to vector<8x64xf32>
      %c0_38 = arith.constant 0 : index
      %c0_39 = arith.constant 0 : index
      %67 = vector.load %arg11[%c0_38, %c0_39] : memref<8x64xf32, #tpu.memory_space<vmem>>, vector<8x64xf32>
      tpu.vector_store %arg11[%c0_38, %c0_39], %66 {strides = array<i32>} : memref<8x64xf32, #tpu.memory_space<vmem>>, vector<8x64xf32>,
    } else {
    }
    %c0_32 = arith.constant 0 : index
    %c0_33 = arith.constant 0 : index
    %60 = vector.load %arg11[%c0_32, %c0_33] : memref<8x64xf32, #tpu.memory_space<vmem>>, vector<8x64xf32>
    %61 = arith.addf %60, %56 : vector<8x64xf32>
    %c0_34 = arith.constant 0 : index
    %c0_35 = arith.constant 0 : index
    %62 = vector.load %arg11[%c0_34, %c0_35] : memref<8x64xf32, #tpu.memory_space<vmem>>, vector<8x64xf32>
    tpu.vector_store %arg11[%c0_34, %c0_35], %61 {strides = array<i32>} : memref<8x64xf32, #tpu.memory_space<vmem>>, vector<8x64xf32>,
    %c1_i32 = arith.constant 1 : i32
    %63 = arith.cmpi eq, %arg1, %c1_i32 : i32
    %64 = arith.extui %63 : i1 to i32
    %c0_i32_36 = arith.constant 0 : i32
    %65 = arith.cmpi ne, %64, %c0_i32_36 : i32
    scf.if %65 {
      %c0_37 = arith.constant 0 : index
      %c0_38 = arith.constant 0 : index
      %66 = vector.load %arg11[%c0_37, %c0_38] : memref<8x64xf32, #tpu.memory_space<vmem>>, vector<8x64xf32>
      %c0_39 = arith.constant 0 : index
      %c0_40 = arith.constant 0 : index
      %c0_41 = arith.constant 0 : index
      %67 = vector.load %arg8[%c0_39, %c0_40, %c0_41] : memref<1x8x64xf32, #tpu.memory_space<vmem>>, vector<1x8x64xf32>
      %68 = vector.shape_cast %67 : vector<1x8x64xf32> to vector<8x64xf32>
      %69 = vector.shape_cast %66 : vector<8x64xf32> to vector<1x8x64xf32>
      tpu.vector_store %arg8[%c0_39, %c0_40, %c0_41], %69 {strides = array<i32>} : memref<1x8x64xf32, #tpu.memory_space<vmem>>, vector<1x8x64xf32>,
    } else {
    }
    return
  }
  func.func @transform_0(%arg0: i32, %arg1: i32) -> (i32, i32, i32) {
    %c0_i32 = arith.constant 0 : i32
    %c0_i32_0 = arith.constant 0 : i32
    %c0_i32_1 = arith.constant 0 : i32
    return %arg0, %c0_i32, %c0_i32_0 : i32, i32, i32
  }
  func.func @transform_1(%arg0: i32, %arg1: i32) -> (i32, i32, i32) {
    %c0_i32 = arith.constant 0 : i32
    %c0_i32_0 = arith.constant 0 : i32
    %c0_i32_1 = arith.constant 0 : i32
    return %arg1, %c0_i32, %c0_i32_0 : i32, i32, i32
  }
  func.func @transform_2(%arg0: i32, %arg1: i32) -> (i32, i32, i32) {
    %c0_i32 = arith.constant 0 : i32
    %c0_i32_0 = arith.constant 0 : i32
    %c0_i32_1 = arith.constant 0 : i32
    return %arg1, %c0_i32, %c0_i32_0 : i32, i32, i32
  }
  func.func @transform_3(%arg0: i32, %arg1: i32) -> (i32, i32) {
    %c0_i32 = arith.constant 0 : i32
    %c0_i32_0 = arith.constant 0 : i32
    %c0_i32_1 = arith.constant 0 : i32
    return %c0_i32, %c0_i32_0 : i32, i32
  }
  func.func @transform_4(%arg0: i32, %arg1: i32) -> (i32, i32) {
    %c0_i32 = arith.constant 0 : i32
    %c0_i32_0 = arith.constant 0 : i32
    %c0_i32_1 = arith.constant 0 : i32
    return %c0_i32, %c0_i32_0 : i32, i32
  }
  func.func @transform_5(%arg0: i32, %arg1: i32) -> (i32, i32) {
    %c0_i32 = arith.constant 0 : i32
    %c0_i32_0 = arith.constant 0 : i32
    %c0_i32_1 = arith.constant 0 : i32
    return %c0_i32, %c0_i32_0 : i32, i32
  }
  func.func @transform_6(%arg0: i32, %arg1: i32) -> (i32, i32, i32) {
    %c0_i32 = arith.constant 0 : i32
    %c0_i32_0 = arith.constant 0 : i32
    %c0_i32_1 = arith.constant 0 : i32
    return %arg0, %c0_i32, %c0_i32_0 : i32, i32, i32
  }
  func.func @transform_7(%arg0: i32, %arg1: i32) -> (i32, i32, i32, i32) {
    %c0_i32 = arith.constant 0 : i32
    %c0_i32_0 = arith.constant 0 : i32
    %c0_i32_1 = arith.constant 0 : i32
    return %arg0, %arg1, %c0_i32, %c0_i32_0 : i32, i32, i32, i32
  }
  func.func @transform_8(%arg0: i32, %arg1: i32) -> (i32, i32, i32, i32) {
    %c0_i32 = arith.constant 0 : i32
    %c0_i32_0 = arith.constant 0 : i32
    %c0_i32_1 = arith.constant 0 : i32
    return %arg0, %arg1, %c0_i32, %c0_i32_0 : i32, i32, i32, i32
  }
}

</mosaic_0001>

<llo_original>
// kernel: tpu_custom_call.1
$region0: #{tpu_custom_call.1}
  #allocation0 [shape = 'u32[]', space=smem, size = 0x4, offset = 0x4, fixed_abs, tag = 'smem constant byte address 0x4 - core index']
  #allocation1 [shape = 'u32[144,128]{1,0:T(1,128)}', space=vmem, size = 0x12000, scoped, tag = 'internal scratch']
  #allocation2 [shape = 'f32[8,64]{1,0:T(8,128)}', space=vmem, size = 0x1000, scoped, tag = 'scratch operand']
  %s0 = inlined_call_operand.hbm [shape: f32[2,8,64], index: 0, kind: input, shape index: {}]
  %s1 = inlined_call_operand.hbm [shape: bf16[2,64,96], index: 1, kind: input, shape index: {}]
  %s2 = inlined_call_operand.hbm [shape: bf16[2,32,64], index: 2, kind: input, shape index: {}]
  %s3 = inlined_call_operand.hbm [shape: f32[8,32], index: 3, kind: input, shape index: {}]
  %s4 = inlined_call_operand.hbm [shape: f32[8,32], index: 4, kind: input, shape index: {}]
  %s5 = inlined_call_operand.vmem [shape: bf16[32,32], index: 5, kind: input, shape index: {}]
  %s6 = inlined_call_operand.hbm [shape: f32[2,8,64], index: 6, kind: output, shape index: {0}]
  %s7 = inlined_call_operand.hbm [shape: bf16[2,2,8,32], index: 7, kind: output, shape index: {1}]
  %s8 = inlined_call_operand.hbm [shape: bf16[2,2,8,32], index: 8, kind: output, shape index: {2}]
  %9 = xla_tuple %s6, %s7, %s8
  %s10 = sld [smem:[#allocation0]]
  $region101: #{tpu_custom_call.1} parent=0
    _
  %s12 = ssub.s32 1, %s10
  %s13 = scalar_select 0, %s12, %s10
  $region1: #{tpu_custom_call.1} parent=0
    #allocation3 [shape = 'u8[8192]{0}', space=vmem, size = 0x2000, scoped, tag = 'input window, operand 0']
    #allocation4 [shape = 's32[2]{0}', space=sflag, size = 0x8, scoped, tag = 'scoped memory for tpu_custom_call.1']
    #allocation5 [shape = 's32[2]{0}', space=sflag, size = 0x8, scoped, tag = 'scoped memory for tpu_custom_call.1']
    #allocation6 [shape = 'u8[32768]{0}', space=vmem, size = 0x8000, scoped, tag = 'input window, operand 1']
    #allocation7 [shape = 's32[2]{0}', space=sflag, size = 0x8, scoped, tag = 'scoped memory for tpu_custom_call.1']
    #allocation8 [shape = 'u8[16384]{0}', space=vmem, size = 0x4000, scoped, tag = 'input window, operand 2']
    #allocation9 [shape = 'u8[4096]{0}', space=vmem, size = 0x1000, scoped, tag = 'input window, operand 3, single buffered']
    #allocation10 [shape = 's32[1]{0}', space=sflag, size = 0x4, scoped, tag = 'scoped memory for tpu_custom_call.1']
    #allocation11 [shape = 'u8[4096]{0}', space=vmem, size = 0x1000, scoped, tag = 'input window, operand 4, single buffered']
    #allocation12 [shape = 'u8[8192]{0}', space=vmem, size = 0x2000, scoped, tag = 'output window, operand 0']
    #allocation13 [shape = 'u8[4096]{0}', space=vmem, size = 0x1000, scoped, tag = 'output window, operand 1']
    #allocation14 [shape = 's32[2]{0}', space=sflag, size = 0x8, scoped, tag = 'scoped memory for tpu_custom_call.1']
    #allocation15 [shape = 'u8[4096]{0}', space=vmem, size = 0x1000, scoped, tag = 'output window, operand 2']
    %14 = vsyncpa [#allocation4], 0
    %s15 = scalar_lea.sflag [#allocation4], 1
    %16 = vsyncpa %s15, 0
    %17 = vsyncpa [#allocation7], 0
    %s18 = scalar_lea.sflag [#allocation7], 1
    %19 = vsyncpa %s18, 0
    %20 = vsyncpa [#allocation10], 0
    %21 = vsyncpa [#allocation5], 0
    %s22 = scalar_lea.sflag [#allocation5], 1
    %23 = vsyncpa %s22, 0
    %24 = vsyncpa [#allocation14], 0
    %s25 = scalar_lea.sflag [#allocation14], 1
    %26 = vsyncpa %s25, 0
    loop: start=0, step=1, limit=6
    $region2: #{tpu_custom_call.1} parent=1 // loop_pre_header
      _
    $region3: #{tpu_custom_call.1} parent=1 // loop_header
      %s28 = sphi 0, %s32
      %p29 = scmp.ge.s32.totalorder %s28, 6
      %s35 = sphi 0, %s47
      %s36 = sphi 0, %s43
      %s37 = sphi 0, %s35
      %s38 = sphi 0, %s36
      %s39 = sphi 0, %s37
      %s40 = sphi 0, %s38
      %s50 = sphi 0, %s52
      %s53 = sphi 0, %s50
      %s54 = sphi 0, %s53
      %s70 = sphi 0, %s54
      %s76 = sphi 0, %s78
      %s79 = sphi 0, %s76
      %s80 = sphi 0, %s79
      %s96 = sphi 0, %s80
      %s102 = sphi 0, %s104
      %s105 = sphi 0, %s102
      %s106 = sphi 0, %s105
      %s122 = sphi 0, %s106
      %s126 = sphi 0, %s126
      %s128 = sphi 0, %s126
      %s129 = sphi 0, %s128
      %s143 = sphi 0, %s129
      %s147 = sphi 0, %s147
      %s149 = sphi 0, %s147
      %s150 = sphi 0, %s149
      %s164 = sphi 0, %s150
      %s168 = sphi 0, %s168
      %s170 = sphi 0, %s168
      %s171 = sphi 0, %s170
      %s185 = sphi 0, %s171
      %s191 = sphi 0, %s193
      %s194 = sphi 0, %s191
      %s195 = sphi 0, %s194
      %s211 = sphi 0, %s195
      %s219 = sphi 0, %s221
      %s222 = sphi 0, %s219
      %s223 = sphi 0, %s222
      %s239 = sphi 0, %s223
      %s247 = sphi 0, %s249
      %s250 = sphi 0, %s247
      %s251 = sphi 0, %s250
      %s267 = sphi 0, %s251
    $region4: #{tpu_custom_call.1} parent=1 // loop_header_branch
      %31 = sbr.rel (%p29) target = $region8
    $region5: #{tpu_custom_call.1} parent=1 // loop_body
      %s33 = ssub.s32 %s28, 1
      %s34 = ssub.s32 %s28, 2
      %s41 = sadd.s32 1, %s36
      %p42 = scmp.ge.s32.totalorder %s41, 2
      %s43 = scalar_select %p42, 0, %s41
      %s44 = sadd.s32 1, %s35
      %s45 = scalar_select %p42, %s44, %s35
      %p46 = scmp.ge.s32.totalorder %s45, 2
      %s47 = scalar_select %p46, 0, %s45
      %s48 = ssub.s32 %s35, %s47
      %p49 = scmp.eq.s32.totalorder %s48, 0
      %s51 = sadd.s32 %s50, 1
      %s52 = scalar_select %p49, %s50, %s51
      %p55 = pneg %p49
      %p56 = scmp.eq.s32.totalorder %s28, 3
      %p57 = por %p55, %p56
      %p58 = scmp.ne.s32.totalorder %s50, %s53
      %p59 = scmp.eq.s32.totalorder %s28, 0
      %p60 = por %p58, %p59
      %p61 = scmp.ne.s32.totalorder %s50, %s53
      %p62 = scmp.eq.s32.totalorder %s33, 3
      %p63 = por %p61, %p62
      %p64 = scmp.ne.s32.totalorder %s53, %s54
      %p65 = scmp.eq.s32.totalorder %s33, 0
      %p66 = por %p64, %p65
      %p67 = scmp.ne.s32.totalorder %s53, %s54
      %p68 = scmp.eq.s32.totalorder %s34, 3
      %p69 = por %p67, %p68
      %p71 = scmp.ne.s32.totalorder %s54, %s70
      %p72 = scmp.eq.s32.totalorder %s34, 0
      %p73 = por %p71, %p72
      %s74 = ssub.s32 %s36, %s43
      %p75 = scmp.eq.s32.totalorder %s74, 0
      %s77 = sadd.s32 %s76, 1
      %s78 = scalar_select %p75, %s76, %s77
      %p81 = pneg %p75
      %p82 = scmp.eq.s32.totalorder %s28, 3
      %p83 = por %p81, %p82
      %p84 = scmp.ne.s32.totalorder %s76, %s79
      %p85 = scmp.eq.s32.totalorder %s28, 0
      %p86 = por %p84, %p85
      %p87 = scmp.ne.s32.totalorder %s76, %s79
      %p88 = scmp.eq.s32.totalorder %s33, 3
      %p89 = por %p87, %p88
      %p90 = scmp.ne.s32.totalorder %s79, %s80
      %p91 = scmp.eq.s32.totalorder %s33, 0
      %p92 = por %p90, %p91
      %p93 = scmp.ne.s32.totalorder %s79, %s80
      %p94 = scmp.eq.s32.totalorder %s34, 3
      %p95 = por %p93, %p94
      %p97 = scmp.ne.s32.totalorder %s80, %s96
      %p98 = scmp.eq.s32.totalorder %s34, 0
      %p99 = por %p97, %p98
      %s100 = ssub.s32 %s36, %s43
      %p101 = scmp.eq.s32.totalorder %s100, 0
      %s103 = sadd.s32 %s102, 1
      %s104 = scalar_select %p101, %s102, %s103
      %p107 = pneg %p101
      %p108 = scmp.eq.s32.totalorder %s28, 3
      %p109 = por %p107, %p108
      %p110 = scmp.ne.s32.totalorder %s102, %s105
      %p111 = scmp.eq.s32.totalorder %s28, 0
      %p112 = por %p110, %p111
      %p113 = scmp.ne.s32.totalorder %s102, %s105
      %p114 = scmp.eq.s32.totalorder %s33, 3
      %p115 = por %p113, %p114
      %p116 = scmp.ne.s32.totalorder %s105, %s106
      %p117 = scmp.eq.s32.totalorder %s33, 0
      %p118 = por %p116, %p117
      %p119 = scmp.ne.s32.totalorder %s105, %s106
      %p120 = scmp.eq.s32.totalorder %s34, 3
      %p121 = por %p119, %p120
      %p123 = scmp.ne.s32.totalorder %s106, %s122
      %p124 = scmp.eq.s32.totalorder %s34, 0
      %p125 = por %p123, %p124
      %s127 = sadd.s32 %s126, 1
      %p130 = scmp.eq.s32.totalorder %s28, 3
      %p131 = scmp.ne.s32.totalorder %s126, %s128
      %p132 = scmp.eq.s32.totalorder %s28, 0
      %p133 = por %p131, %p132
      %p134 = scmp.ne.s32.totalorder %s126, %s128
      %p135 = scmp.eq.s32.totalorder %s33, 3
      %p136 = por %p134, %p135
      %p137 = scmp.ne.s32.totalorder %s128, %s129
      %p138 = scmp.eq.s32.totalorder %s33, 0
      %p139 = por %p137, %p138
      %p140 = scmp.ne.s32.totalorder %s128, %s129
      %p141 = scmp.eq.s32.totalorder %s34, 3
      %p142 = por %p140, %p141
      %p144 = scmp.ne.s32.totalorder %s129, %s143
      %p145 = scmp.eq.s32.totalorder %s34, 0
      %p146 = por %p144, %p145
      %s148 = sadd.s32 %s147, 1
      %p151 = scmp.eq.s32.totalorder %s28, 3
      %p152 = scmp.ne.s32.totalorder %s147, %s149
      %p153 = scmp.eq.s32.totalorder %s28, 0
      %p154 = por %p152, %p153
      %p155 = scmp.ne.s32.totalorder %s147, %s149
      %p156 = scmp.eq.s32.totalorder %s33, 3
      %p157 = por %p155, %p156
      %p158 = scmp.ne.s32.totalorder %s149, %s150
      %p159 = scmp.eq.s32.totalorder %s33, 0
      %p160 = por %p158, %p159
      %p161 = scmp.ne.s32.totalorder %s149, %s150
      %p162 = scmp.eq.s32.totalorder %s34, 3
      %p163 = por %p161, %p162
      %p165 = scmp.ne.s32.totalorder %s150, %s164
      %p166 = scmp.eq.s32.totalorder %s34, 0
      %p167 = por %p165, %p166
      %s169 = sadd.s32 %s168, 1
      %p172 = scmp.eq.s32.totalorder %s28, 3
      %p173 = scmp.ne.s32.totalorder %s168, %s170
      %p174 = scmp.eq.s32.totalorder %s28, 0
      %p175 = por %p173, %p174
      %p176 = scmp.ne.s32.totalorder %s168, %s170
      %p177 = scmp.eq.s32.totalorder %s33, 3
      %p178 = por %p176, %p177
      %p179 = scmp.ne.s32.totalorder %s170, %s171
      %p180 = scmp.eq.s32.totalorder %s33, 0
      %p181 = por %p179, %p180
      %p182 = scmp.ne.s32.totalorder %s170, %s171
      %p183 = scmp.eq.s32.totalorder %s34, 3
      %p184 = por %p182, %p183
      %p186 = scmp.ne.s32.totalorder %s171, %s185
      %p187 = scmp.eq.s32.totalorder %s34, 0
      %p188 = por %p186, %p187
      %s189 = ssub.s32 %s35, %s47
      %p190 = scmp.eq.s32.totalorder %s189, 0
      %s192 = sadd.s32 %s191, 1
      %s193 = scalar_select %p190, %s191, %s192
      %p196 = pneg %p190
      %p197 = scmp.eq.s32.totalorder %s28, 3
      %p198 = por %p196, %p197
      %p199 = scmp.ne.s32.totalorder %s191, %s194
      %p200 = scmp.eq.s32.totalorder %s28, 0
      %p201 = por %p199, %p200
      %p202 = scmp.ne.s32.totalorder %s191, %s194
      %p203 = scmp.eq.s32.totalorder %s33, 3
      %p204 = por %p202, %p203
      %p205 = scmp.ne.s32.totalorder %s194, %s195
      %p206 = scmp.eq.s32.totalorder %s33, 0
      %p207 = por %p205, %p206
      %p208 = scmp.ne.s32.totalorder %s194, %s195
      %p209 = scmp.eq.s32.totalorder %s34, 3
      %p210 = por %p208, %p209
      %p212 = scmp.ne.s32.totalorder %s195, %s211
      %p213 = scmp.eq.s32.totalorder %s34, 0
      %p214 = por %p212, %p213
      %s215 = ssub.s32 %s35, %s47
      %s216 = ssub.s32 %s36, %s43
      %s217 = sor.u32 %s215, %s216
      %p218 = scmp.eq.s32.totalorder %s217, 0
      %s220 = sadd.s32 %s219, 1
      %s221 = scalar_select %p218, %s219, %s220
      %p224 = pneg %p218
      %p225 = scmp.eq.s32.totalorder %s28, 3
      %p226 = por %p224, %p225
      %p227 = scmp.ne.s32.totalorder %s219, %s222
      %p228 = scmp.eq.s32.totalorder %s28, 0
      %p229 = por %p227, %p228
      %p230 = scmp.ne.s32.totalorder %s219, %s222
      %p231 = scmp.eq.s32.totalorder %s33, 3
      %p232 = por %p230, %p231
      %p233 = scmp.ne.s32.totalorder %s222, %s223
      %p234 = scmp.eq.s32.totalorder %s33, 0
      %p235 = por %p233, %p234
      %p236 = scmp.ne.s32.totalorder %s222, %s223
      %p237 = scmp.eq.s32.totalorder %s34, 3
      %p238 = por %p236, %p237
      %p240 = scmp.ne.s32.totalorder %s223, %s239
      %p241 = scmp.eq.s32.totalorder %s34, 0
      %p242 = por %p240, %p241
      %s243 = ssub.s32 %s35, %s47
      %s244 = ssub.s32 %s36, %s43
      %s245 = sor.u32 %s243, %s244
      %p246 = scmp.eq.s32.totalorder %s245, 0
      %s248 = sadd.s32 %s247, 1
      %s249 = scalar_select %p246, %s247, %s248
      %p252 = pneg %p246
      %p253 = scmp.eq.s32.totalorder %s28, 3
      %p254 = por %p252, %p253
      %p255 = scmp.ne.s32.totalorder %s247, %s250
      %p256 = scmp.eq.s32.totalorder %s28, 0
      %p257 = por %p255, %p256
      %p258 = scmp.ne.s32.totalorder %s247, %s250
      %p259 = scmp.eq.s32.totalorder %s33, 3
      %p260 = por %p258, %p259
      %p261 = scmp.ne.s32.totalorder %s250, %s251
      %p262 = scmp.eq.s32.totalorder %s33, 0
      %p263 = por %p261, %p262
      %p264 = scmp.ne.s32.totalorder %s250, %s251
      %p265 = scmp.eq.s32.totalorder %s34, 3
      %p266 = por %p264, %p265
      %p268 = scmp.ne.s32.totalorder %s251, %s267
      %p269 = scmp.eq.s32.totalorder %s34, 0
      %p270 = por %p268, %p269
      %p271 = scmp.le.s32.totalorder 1, %s28
      %p272 = scmp.lt.s32.totalorder %s28, 5
      %p273 = pnand %p271, %p272
      %p274 = pneg %p273
      // Predicated region
      $region9: #{tpu_custom_call.1} parent=5 // pred_check
        _
      $region10: #{tpu_custom_call.1} parent=5 // pred_check_branch
        %276 = sbr.rel (%p273) target = $region12
      $region11: #{tpu_custom_call.1} parent=5 // pred_region
        %s277 = ssub.s32 %s28, 1
        // Predicated region
        $region13: #{tpu_custom_call.1} parent=11 // pred_check
          %p278 = pneg %p139
        $region14: #{tpu_custom_call.1} parent=11 // pred_check_branch
          %280 = sbr.rel (%p278) target = $region16
        $region15: #{tpu_custom_call.1} parent=11 // pred_region
          %s282 = ssub.s32 128, 128
          %283 = vsyncadd [#allocation10], %s282
          %s285 = sshll.u32 [#allocation9], 4
          %s286 = int_to_ptr.vmem [resolvable:$true] %s285
          %288 = dma.hbm_to_vmem [thread:$0]  %s3, 128, %s286, [#allocation10]
        $region16: #{tpu_custom_call.1} parent=11 // pred_fallthru
          _
        // Predicated region
        $region17: #{tpu_custom_call.1} parent=11 // pred_check
          %p289 = pneg %p160
        $region18: #{tpu_custom_call.1} parent=11 // pred_check_branch
          %291 = sbr.rel (%p289) target = $region20
        $region19: #{tpu_custom_call.1} parent=11 // pred_region
          %s293 = ssub.s32 128, 128
          %294 = vsyncadd [#allocation10], %s293
          %s296 = sshll.u32 [#allocation11], 4
          %s297 = int_to_ptr.vmem [resolvable:$true] %s296
          %299 = dma.hbm_to_vmem [thread:$0]  %s4, 128, %s297, [#allocation10]
        $region20: #{tpu_custom_call.1} parent=11 // pred_fallthru
          _
        // Predicated region
        $region21: #{tpu_custom_call.1} parent=11 // pred_check
          %p300 = pneg %p181
        $region22: #{tpu_custom_call.1} parent=11 // pred_check_branch
          %302 = sbr.rel (%p300) target = $region24
        $region23: #{tpu_custom_call.1} parent=11 // pred_region
          _
        $region24: #{tpu_custom_call.1} parent=11 // pred_fallthru
          _
      $region12: #{tpu_custom_call.1} parent=5 // pred_fallthru
        _
      %p303 = scmp.lt.s32.totalorder %s28, 4
      // Predicated region
      $region25: #{tpu_custom_call.1} parent=5 // pred_check
        %p304 = pneg %p303
      $region26: #{tpu_custom_call.1} parent=5 // pred_check_branch
        %306 = sbr.rel (%p304) target = $region28
      $region27: #{tpu_custom_call.1} parent=5 // pred_region
        // Predicated region
        $region29: #{tpu_custom_call.1} parent=27 // pred_check
          %p307 = pneg %p60
        $region30: #{tpu_custom_call.1} parent=27 // pred_check_branch
          %309 = sbr.rel (%p307) target = $region32
        $region31: #{tpu_custom_call.1} parent=27 // pred_region
          %s310 = sand.u32 %s50, 1
          %s311 = scalar_lea.sflag [#allocation4], %s310
          %s312 = sand.u32 %s50, 1
          %s313 = smul.addr %s312, 8
          %s314 = scalar_lea.vmem [#allocation3], %s313
          %s316 = ssub.s32 128, 128
          %317 = vsyncadd %s311, %s316
          %s318 = smul.addr %s35, 128
          %s319 = scalar_lea.hbm %s0, %s318
          %s321 = sshll.u32 %s314, 4
          %s322 = int_to_ptr.vmem [resolvable:$true] %s321
          %324 = dma.hbm_to_vmem [thread:$0]  %s319, 128, %s322, %s311
        $region32: #{tpu_custom_call.1} parent=27 // pred_fallthru
          _
        // Predicated region
        $region33: #{tpu_custom_call.1} parent=27 // pred_check
          %p325 = pneg %p86
        $region34: #{tpu_custom_call.1} parent=27 // pred_check_branch
          %327 = sbr.rel (%p325) target = $region36
        $region35: #{tpu_custom_call.1} parent=27 // pred_region
          %s328 = sand.u32 %s28, 1
          %s329 = scalar_lea.sflag [#allocation7], %s328
          %s330 = sand.u32 %s76, 1
          %s331 = smul.addr %s330, 32
          %s332 = scalar_lea.vmem [#allocation6], %s331
          %s334 = ssub.s32 512, 512
          %335 = vsyncadd %s329, %s334
          %s336 = smul.addr %s36, 8
          %s337 = smul.addr %s336, 64
          %s338 = scalar_lea.hbm %s1, %s337
          %s339 = sshll.u32 %s332, 4
          %s340 = int_to_ptr.vmem [resolvable:$true] %s339
          %345 = dma.hbm_to_vmem [thread:$0]  %s338, 512, %s340, %s329, 64, 64, 4
        $region36: #{tpu_custom_call.1} parent=27 // pred_fallthru
          _
        // Predicated region
        $region37: #{tpu_custom_call.1} parent=27 // pred_check
          %p346 = pneg %p112
        $region38: #{tpu_custom_call.1} parent=27 // pred_check_branch
          %348 = sbr.rel (%p346) target = $region40
        $region39: #{tpu_custom_call.1} parent=27 // pred_region
          %s349 = sand.u32 %s28, 1
          %s350 = scalar_lea.sflag [#allocation7], %s349
          %s351 = sand.u32 %s102, 1
          %s352 = smul.addr %s351, 16
          %s353 = scalar_lea.vmem [#allocation8], %s352
          %s355 = ssub.s32 256, 256
          %356 = vsyncadd %s350, %s355
          %s357 = smul.addr %s36, 4
          %s358 = smul.addr %s357, 64
          %s359 = scalar_lea.hbm %s2, %s358
          %s360 = sshll.u32 %s353, 4
          %s361 = int_to_ptr.vmem [resolvable:$true] %s360
          %366 = dma.hbm_to_vmem [thread:$0]  %s359, 256, %s361, %s350, 64, 64, 4
        $region40: #{tpu_custom_call.1} parent=27 // pred_fallthru
          _
      $region28: #{tpu_custom_call.1} parent=5 // pred_fallthru
        _
      %p367 = scmp.le.s32.totalorder 1, %s28
      %p368 = scmp.lt.s32.totalorder %s28, 5
      %p369 = pnand %p367, %p368
      %p370 = pneg %p369
      // Predicated region
      $region41: #{tpu_custom_call.1} parent=5 // pred_check
        _
      $region42: #{tpu_custom_call.1} parent=5 // pred_check_branch
        %372 = sbr.rel (%p369) target = $region44
      $region43: #{tpu_custom_call.1} parent=5 // pred_region
        %s373 = ssub.s32 %s28, 1
        %s374 = sand.u32 %s53, 1
        %s375 = scalar_lea.sflag [#allocation4], %s374
        %s376 = sand.u32 %s53, 1
        %s377 = smul.addr %s376, 8
        %s378 = scalar_lea.vmem [#allocation3], %s377
        // Predicated region
        $region45: #{tpu_custom_call.1} parent=43 // pred_check
          %p379 = pneg %p66
        $region46: #{tpu_custom_call.1} parent=43 // pred_check_branch
          %381 = sbr.rel (%p379) target = $region48
        $region47: #{tpu_custom_call.1} parent=43 // pred_region
          %382 = dma.done %s375, 128
        $region48: #{tpu_custom_call.1} parent=43 // pred_fallthru
          _
        %s383 = sand.u32 %s33, 1
        %s384 = scalar_lea.sflag [#allocation7], %s383
        %s385 = sand.u32 %s79, 1
        %s386 = smul.addr %s385, 32
        %s387 = scalar_lea.vmem [#allocation6], %s386
        // Predicated region
        $region49: #{tpu_custom_call.1} parent=43 // pred_check
          %p388 = pneg %p92
        $region50: #{tpu_custom_call.1} parent=43 // pred_check_branch
          %390 = sbr.rel (%p388) target = $region52
        $region51: #{tpu_custom_call.1} parent=43 // pred_region
          %391 = dma.done %s384, 512
        $region52: #{tpu_custom_call.1} parent=43 // pred_fallthru
          _
        %s392 = sand.u32 %s33, 1
        %s393 = scalar_lea.sflag [#allocation7], %s392
        %s394 = sand.u32 %s105, 1
        %s395 = smul.addr %s394, 16
        %s396 = scalar_lea.vmem [#allocation8], %s395
        // Predicated region
        $region53: #{tpu_custom_call.1} parent=43 // pred_check
          %p397 = pneg %p118
        $region54: #{tpu_custom_call.1} parent=43 // pred_check_branch
          %399 = sbr.rel (%p397) target = $region56
        $region55: #{tpu_custom_call.1} parent=43 // pred_region
          %400 = dma.done %s393, 256
        $region56: #{tpu_custom_call.1} parent=43 // pred_fallthru
          _
        // Predicated region
        $region57: #{tpu_custom_call.1} parent=43 // pred_check
          %p401 = pneg %p139
        $region58: #{tpu_custom_call.1} parent=43 // pred_check_branch
          %403 = sbr.rel (%p401) target = $region60
        $region59: #{tpu_custom_call.1} parent=43 // pred_region
          %404 = dma.done [#allocation10], 128
        $region60: #{tpu_custom_call.1} parent=43 // pred_fallthru
          _
        // Predicated region
        $region61: #{tpu_custom_call.1} parent=43 // pred_check
          %p405 = pneg %p160
        $region62: #{tpu_custom_call.1} parent=43 // pred_check_branch
          %407 = sbr.rel (%p405) target = $region64
        $region63: #{tpu_custom_call.1} parent=43 // pred_region
          %408 = dma.done [#allocation10], 128
        $region64: #{tpu_custom_call.1} parent=43 // pred_fallthru
          _
        %s409 = sand.u32 %s53, 1
        %s410 = scalar_lea.sflag [#allocation4], %s409
        %s411 = sand.u32 %s53, 1
        %s412 = smul.addr %s411, 8
        %s413 = scalar_lea.vmem [#allocation3], %s412
        %p414 = pneg %p66
        %p415 = pneg %p63
        %s416 = sand.u32 %s33, 1
        %s417 = scalar_lea.sflag [#allocation7], %s416
        %s418 = sand.u32 %s79, 1
        %s419 = smul.addr %s418, 32
        %s420 = scalar_lea.vmem [#allocation6], %s419
        %p421 = pneg %p92
        %p422 = pneg %p89
        %s423 = sand.u32 %s33, 1
        %s424 = scalar_lea.sflag [#allocation7], %s423
        %s425 = sand.u32 %s105, 1
        %s426 = smul.addr %s425, 16
        %s427 = scalar_lea.vmem [#allocation8], %s426
        %p428 = pneg %p118
        %p429 = pneg %p115
        %p430 = pneg %p139
        %p431 = pneg %p136
        %p432 = pneg %p160
        %p433 = pneg %p157
        %p434 = pneg %p181
        %p435 = pneg %p178
        %p436 = pneg %p207
        %p437 = pneg %p204
        %s438 = sand.u32 %s194, 1
        %s439 = scalar_lea.sflag [#allocation5], %s438
        %s440 = sand.u32 %s194, 1
        %s441 = smul.addr %s440, 8
        %s442 = scalar_lea.vmem [#allocation12], %s441
        %p443 = pneg %p235
        %p444 = pneg %p232
        %s445 = sand.u32 %s33, 1
        %s446 = scalar_lea.sflag [#allocation14], %s445
        %s447 = sand.u32 %s222, 1
        %s448 = smul.addr %s447, 4
        %s449 = scalar_lea.vmem [#allocation13], %s448
        %p450 = pneg %p263
        %p451 = pneg %p260
        %s452 = sand.u32 %s33, 1
        %s453 = scalar_lea.sflag [#allocation14], %s452
        %s454 = sand.u32 %s250, 1
        %s455 = smul.addr %s454, 4
        %s456 = scalar_lea.vmem [#allocation15], %s455
        %v458 = vld [vmem:[%s378] sm:$0xff]
        %v459 = vpack.c.bf16 %v458, %v458
        %v460 = vld [vmem:[%s387] sm:$0xf]
        %v461 = vld [vmem:[%s387 + $0x4] sm:$0xf]
        %v462 = vld [vmem:[%s387 + $0x8] sm:$0xf]
        %v463 = vld [vmem:[%s387 + $0xc] sm:$0xf]
        %v464 = vld [vmem:[%s387 + $0x10] sm:$0xf]
        %v465 = vld [vmem:[%s387 + $0x14] sm:$0xf]
        %v466 = vld [vmem:[%s387 + $0x18] sm:$0xf]
        %v467 = vld [vmem:[%s387 + $0x1c] sm:$0xf]
        %v476 = vunpack.c.l.b16 %v460
        %v477 = vunpack.c.l.b16 %v461
        %v478 = vunpack.c.l.b16 %v462
        %v479 = vunpack.c.l.b16 %v463
        %v480 = vunpack.c.l.b16 %v464
        %v481 = vunpack.c.l.b16 %v465
        %v482 = vunpack.c.l.b16 %v466
        %v483 = vunpack.c.l.b16 %v467
        %v484 = vpack.c.b16 %v477, %v476
        %v485 = vpack.c.b16 %v479, %v478
        %v486 = vpack.c.b16 %v481, %v480
        %v487 = vpack.c.b16 %v483, %v482
        %vm492 = vcmask 523264
        %v494 = vsel %vm492, %v459, 0
        %496 = vmatprep.subr.bf16.mxu0 0
        %497 = vmatpush1.bf16.msra.mxu0 %v484
        %498 = vmatprep.subr.bf16.mxu0 0
        %499 = vmatpush1.bf16.msra.mxu0 %v485
        %500 = vmatprep.subr.bf16.mxu0 0
        %501 = vmatpush1.bf16.msra.mxu0 %v486
        %502 = vmatprep.subr.bf16.mxu0 0
        %503 = vmatpush1.bf16.msra.mxu0 %v487
        %504 = vmatprep.subr.bf16.mxu0 0
        %505 = vmatpush1.bf16.msra.mxu0 0
        %506 = vmatprep.subr.bf16.mxu0 0
        %507 = vmatpush1.bf16.msra.mxu0 0
        %508 = vmatprep.subr.bf16.mxu0 0
        %509 = vmatpush1.bf16.msra.mxu0 0
        %510 = vmatprep.subr.bf16.mxu0 0
        %511 = vmatpush1.bf16.msra.mxu0 0
        %512 = vmatprep.subr.bf16.mxu0 0
        %513 = vmatpush1.bf16.msra.mxu0 0
        %514 = vmatprep.subr.bf16.mxu0 0
        %515 = vmatpush1.bf16.msra.mxu0 0
        %516 = vmatprep.subr.bf16.mxu0 0
        %517 = vmatpush1.bf16.msra.mxu0 0
        %518 = vmatprep.subr.bf16.mxu0 0
        %519 = vmatpush1.bf16.msra.mxu0 0
        %520 = vmatprep.subr.bf16.mxu0 0
        %521 = vmatpush1.bf16.msra.mxu0 0
        %522 = vmatprep.subr.bf16.mxu0 0
        %523 = vmatpush1.bf16.msra.mxu0 0
        %524 = vmatprep.subr.bf16.mxu0 0
        %525 = vmatpush1.bf16.msra.mxu0 0
        %526 = vmatprep.subr.bf16.mxu0 0
        %527 = vmatpush1.bf16.msra.mxu0 0
        %528 = vmatprep.mubr.bf16.mxu0 0
        %529 = vmatmul.mubr.bf16.gmra.mrb[0].mxu0 %v494
        %v530 = vpop.f32.mrb[0].mxu0
        %v531 = vadd.f32 0.0, %v530
        %v532 = vpop.f32.mrb[0].mxu0
        %v533 = vpop.f32.mrb[0].mxu0
        %v534 = vpop.f32.mrb[0].mxu0
        %535 = vdwg.mxu0
        %v536 = vld [vmem:[#allocation9] sm:$0xff]
        %v537 = vld [vmem:[#allocation11] sm:$0xff]
        %v538 = vld [vmem:[%s5] sm:$0xf]
        %v539 = vld [vmem:[%s5 + $0x4] sm:$0xf]
        %v540 = vld [vmem:[%s5 + $0x8] sm:$0xf]
        %v541 = vld [vmem:[%s5 + $0xc] sm:$0xf]
        %v542 = vpack.c.bf16 %v531, %v531
        %v547 = vunpack.c.l.b16 %v538
        %v548 = vunpack.c.l.b16 %v539
        %v549 = vunpack.c.l.b16 %v540
        %v550 = vunpack.c.l.b16 %v541
        %v551 = vpack.c.b16 %v548, %v547
        %v552 = vpack.c.b16 %v550, %v549
        %vm555 = vcmask 261120
        %v557 = vsel %vm555, %v542, 0
        %559 = vmatprep.subr.bf16.mxu0 0
        %560 = vmatpush1.bf16.msra.mxu0 %v551
        %561 = vmatprep.subr.bf16.mxu0 0
        %562 = vmatpush1.bf16.msra.mxu0 %v552
        %563 = vmatprep.subr.bf16.mxu0 0
        %564 = vmatpush1.bf16.msra.mxu0 0
        %565 = vmatprep.subr.bf16.mxu0 0
        %566 = vmatpush1.bf16.msra.mxu0 0
        %567 = vmatprep.subr.bf16.mxu0 0
        %568 = vmatpush1.bf16.msra.mxu0 0
        %569 = vmatprep.subr.bf16.mxu0 0
        %570 = vmatpush1.bf16.msra.mxu0 0
        %571 = vmatprep.subr.bf16.mxu0 0
        %572 = vmatpush1.bf16.msra.mxu0 0
        %573 = vmatprep.subr.bf16.mxu0 0
        %574 = vmatpush1.bf16.msra.mxu0 0
        %575 = vmatprep.subr.bf16.mxu0 0
        %576 = vmatpush1.bf16.msra.mxu0 0
        %577 = vmatprep.subr.bf16.mxu0 0
        %578 = vmatpush1.bf16.msra.mxu0 0
        %579 = vmatprep.subr.bf16.mxu0 0
        %580 = vmatpush1.bf16.msra.mxu0 0
        %581 = vmatprep.subr.bf16.mxu0 0
        %582 = vmatpush1.bf16.msra.mxu0 0
        %583 = vmatprep.subr.bf16.mxu0 0
        %584 = vmatpush1.bf16.msra.mxu0 0
        %585 = vmatprep.subr.bf16.mxu0 0
        %586 = vmatpush1.bf16.msra.mxu0 0
        %587 = vmatprep.subr.bf16.mxu0 0
        %588 = vmatpush1.bf16.msra.mxu0 0
        %589 = vmatprep.subr.bf16.mxu0 0
        %590 = vmatpush1.bf16.msra.mxu0 0
        %591 = vmatprep.mubr.bf16.mxu0 0
        %592 = vmatmul.mubr.bf16.gmra.mrb[0].mxu0 %v557
        %v593 = vpop.f32.mrb[0].mxu0
        %v594 = vadd.f32 0.0, %v593
        %v595 = vpop.f32.mrb[0].mxu0
        %v596 = vpop.f32.mrb[0].mxu0
        %v597 = vpop.f32.mrb[0].mxu0
        %598 = vdwg.mxu0
        %v599 = vmul.f32 %v531, %v536
        %v600 = vmul.f32 %v594, %v537
        %v601 = vadd.f32 %v599, %v600
        %603 = vrot.lane.b32.xlu0 %v542, 96
        %v604 = vpop.permute.xlu0 %603
        %v606 = vsel %vm555, %v604, 0
        %608 = vmatprep.subr.bf16.mxu0 0
        %609 = vmatpush1.bf16.msra.mxu0 %v551
        %610 = vmatprep.subr.bf16.mxu0 0
        %611 = vmatpush1.bf16.msra.mxu0 %v552
        %612 = vmatprep.subr.bf16.mxu0 0
        %613 = vmatpush1.bf16.msra.mxu0 0
        %614 = vmatprep.subr.bf16.mxu0 0
        %615 = vmatpush1.bf16.msra.mxu0 0
        %616 = vmatprep.subr.bf16.mxu0 0
        %617 = vmatpush1.bf16.msra.mxu0 0
        %618 = vmatprep.subr.bf16.mxu0 0
        %619 = vmatpush1.bf16.msra.mxu0 0
        %620 = vmatprep.subr.bf16.mxu0 0
        %621 = vmatpush1.bf16.msra.mxu0 0
        %622 = vmatprep.subr.bf16.mxu0 0
        %623 = vmatpush1.bf16.msra.mxu0 0
        %624 = vmatprep.subr.bf16.mxu0 0
        %625 = vmatpush1.bf16.msra.mxu0 0
        %626 = vmatprep.subr.bf16.mxu0 0
        %627 = vmatpush1.bf16.msra.mxu0 0
        %628 = vmatprep.subr.bf16.mxu0 0
        %629 = vmatpush1.bf16.msra.mxu0 0
        %630 = vmatprep.subr.bf16.mxu0 0
        %631 = vmatpush1.bf16.msra.mxu0 0
        %632 = vmatprep.subr.bf16.mxu0 0
        %633 = vmatpush1.bf16.msra.mxu0 0
        %634 = vmatprep.subr.bf16.mxu0 0
        %635 = vmatpush1.bf16.msra.mxu0 0
        %636 = vmatprep.subr.bf16.mxu0 0
        %637 = vmatpush1.bf16.msra.mxu0 0
        %638 = vmatprep.subr.bf16.mxu0 0
        %639 = vmatpush1.bf16.msra.mxu0 0
        %640 = vmatprep.mubr.bf16.mxu0 0
        %641 = vmatmul.mubr.bf16.gmra.mrb[0].mxu0 %v606
        %v642 = vpop.f32.mrb[0].mxu0
        %v643 = vadd.f32 0.0, %v642
        %v644 = vpop.f32.mrb[0].mxu0
        %v645 = vpop.f32.mrb[0].mxu0
        %v646 = vpop.f32.mrb[0].mxu0
        %647 = vdwg.mxu0
        %649 = vrot.lane.b32.xlu0 %v536, 32
        %v650 = vpop.permute.xlu0 %649
        %v652 = vmul.f32 %v531, %v650
        %v653 = vmul.f32 %v643, %v537
        %655 = vrot.lane.b32.xlu0 %v653, 32
        %v656 = vpop.permute.xlu0 %655
        %v658 = vadd.f32 %v652, %v656
        %v659 = vpack.c.bf16 %v658, %v658
        %v661 = vunpack.c.l.b16 %v659
        %v662 = vpack.c.b16 %v661, %v661
        %663 = vrot.lane.b32.xlu0 %v662, 96
        %v664 = vpop.permute.xlu0 %663
        %vm666 = vcmask 257024
        %667 = vst.msk [vmem:[%s449] sm:$0xf] %vm666, %v664
        %v668 = vunpack.c.l.b16 %v542
        %v669 = vpack.c.b16 %v668, %v668
        %670 = vrot.lane.b32.xlu0 %v669, 64
        %v671 = vpop.permute.xlu0 %670
        %673 = vst.msk [vmem:[%s456] sm:$0xf] %vm666, %v671
        %v674 = vmul.f32 %v601, 0.17677669
        %v675 = vpack.c.bf16 %v674, %v674
        %676 = vrot.lane.b32.xlu0 %v659, 96
        %v677 = vpop.permute.xlu0 %676
        %v679 = vsel %vm555, %v675, 0
        %v682 = vsel %vm555, %v677, 0
        %684 = vmatprep.subr.bf16.mxu0 0
        %685 = vmatpush1.bf16.xpose.msra.mxu0 %v682
        %686 = vmatprep.subr.bf16.mxu0 0
        %687 = vmatpush1.bf16.xpose.msra.mxu0 0
        %688 = vmatprep.subr.bf16.mxu0 0
        %689 = vmatpush1.bf16.xpose.msra.mxu0 0
        %690 = vmatprep.subr.bf16.mxu0 0
        %691 = vmatpush1.bf16.xpose.msra.mxu0 0
        %692 = vmatprep.subr.bf16.mxu0 0
        %693 = vmatpush1.bf16.xpose.msra.mxu0 0
        %694 = vmatprep.subr.bf16.mxu0 0
        %695 = vmatpush1.bf16.xpose.msra.mxu0 0
        %696 = vmatprep.subr.bf16.mxu0 0
        %697 = vmatpush1.bf16.xpose.msra.mxu0 0
        %698 = vmatprep.subr.bf16.mxu0 0
        %699 = vmatpush1.bf16.xpose.msra.mxu0 0
        %700 = vmatprep.subr.bf16.mxu0 0
        %701 = vmatpush1.bf16.xpose.msra.mxu0 0
        %702 = vmatprep.subr.bf16.mxu0 0
        %703 = vmatpush1.bf16.xpose.msra.mxu0 0
        %704 = vmatprep.subr.bf16.mxu0 0
        %705 = vmatpush1.bf16.xpose.msra.mxu0 0
        %706 = vmatprep.subr.bf16.mxu0 0
        %707 = vmatpush1.bf16.xpose.msra.mxu0 0
        %708 = vmatprep.subr.bf16.mxu0 0
        %709 = vmatpush1.bf16.xpose.msra.mxu0 0
        %710 = vmatprep.subr.bf16.mxu0 0
        %711 = vmatpush1.bf16.xpose.msra.mxu0 0
        %712 = vmatprep.subr.bf16.mxu0 0
        %713 = vmatpush1.bf16.xpose.msra.mxu0 0
        %714 = vmatprep.subr.bf16.mxu0 0
        %715 = vmatpush1.bf16.xpose.msra.mxu0 0
        %716 = vmatprep.mubr.bf16.mxu0 0
        %717 = vmatmul.mubr.bf16.gmra.mrb[0].mxu0 %v679
        %v718 = vpop.f32.mrb[0].mxu0
        %v719 = vadd.f32 0.0, %v718
        %v720 = vpop.f32.mrb[0].mxu0
        %v721 = vpop.f32.mrb[0].mxu0
        %v722 = vpop.f32.mrb[0].mxu0
        %723 = vdwg.mxu0
        %v724 = vlaneseq
        %v725 = vshrl.u32 %v724, 7
        %v726 = vlaneseq
        %v727 = vand.u32 %v726, 127
        %vm728 = vcmp.le.s32.totalorder %v727, %v725
        %v729 = vsel %vm728, %v719, -1e+30
        %vm730 = vcmask 64512
        %v731 = vsel %vm730, %v729, -inf
        %732 = vmax.xlane.f32.xlu0 %v731
        %v733 = vpop.xlane.xlu0 %732
        %v734 = vsub.f32 %v729, %v733
        %v735 = vmul.f32 %v734, 1.442695
        %v736 = vpow.pop %v735
        %v737 = vsel %vm730, %v736, 0.0
        %738 = vadd.xlane.f32.xlu0 %v737
        %v739 = vpop.xlane.xlu0 %738
        %v740 = vrcp.pop %v739
        %v741 = vmul.f32 %v736, %v740
        %v742 = vpack.c.bf16 %v741, %v741
        %743 = vrot.lane.b32.xlu0 %v542, 64
        %v744 = vpop.permute.xlu0 %743
        %v746 = vsel %vm730, %v742, 0
        %vm748 = vcmask 1043456
        %v750 = vsel %vm748, %v744, 0
        %752 = vmatprep.subr.bf16.mxu0 0
        %753 = vmatpush1.bf16.msra.mxu0 %v750
        %754 = vmatprep.subr.bf16.mxu0 0
        %755 = vmatpush1.bf16.msra.mxu0 0
        %756 = vmatprep.subr.bf16.mxu0 0
        %757 = vmatpush1.bf16.msra.mxu0 0
        %758 = vmatprep.subr.bf16.mxu0 0
        %759 = vmatpush1.bf16.msra.mxu0 0
        %760 = vmatprep.subr.bf16.mxu0 0
        %761 = vmatpush1.bf16.msra.mxu0 0
        %762 = vmatprep.subr.bf16.mxu0 0
        %763 = vmatpush1.bf16.msra.mxu0 0
        %764 = vmatprep.subr.bf16.mxu0 0
        %765 = vmatpush1.bf16.msra.mxu0 0
        %766 = vmatprep.subr.bf16.mxu0 0
        %767 = vmatpush1.bf16.msra.mxu0 0
        %768 = vmatprep.subr.bf16.mxu0 0
        %769 = vmatpush1.bf16.msra.mxu0 0
        %770 = vmatprep.subr.bf16.mxu0 0
        %771 = vmatpush1.bf16.msra.mxu0 0
        %772 = vmatprep.subr.bf16.mxu0 0
        %773 = vmatpush1.bf16.msra.mxu0 0
        %774 = vmatprep.subr.bf16.mxu0 0
        %775 = vmatpush1.bf16.msra.mxu0 0
        %776 = vmatprep.subr.bf16.mxu0 0
        %777 = vmatpush1.bf16.msra.mxu0 0
        %778 = vmatprep.subr.bf16.mxu0 0
        %779 = vmatpush1.bf16.msra.mxu0 0
        %780 = vmatprep.subr.bf16.mxu0 0
        %781 = vmatpush1.bf16.msra.mxu0 0
        %782 = vmatprep.subr.bf16.mxu0 0
        %783 = vmatpush1.bf16.msra.mxu0 0
        %784 = vmatprep.mubr.bf16.mxu0 0
        %785 = vmatmul.mubr.bf16.gmra.mrb[0].mxu0 %v746
        %v786 = vpop.f32.mrb[0].mxu0
        %v787 = vadd.f32 0.0, %v786
        %v788 = vpop.f32.mrb[0].mxu0
        %v789 = vpop.f32.mrb[0].mxu0
        %v790 = vpop.f32.mrb[0].mxu0
        %791 = vdwg.mxu0
        %v792 = vpack.c.bf16 %v787, %v787
        %v793 = vld [vmem:[%s396] sm:$0xf]
        %v794 = vld [vmem:[%s396 + $0x4] sm:$0xf]
        %v795 = vld [vmem:[%s396 + $0x8] sm:$0xf]
        %v796 = vld [vmem:[%s396 + $0xc] sm:$0xf]
        %v801 = vunpack.c.l.b16 %v793
        %v802 = vunpack.c.l.b16 %v794
        %v803 = vunpack.c.l.b16 %v795
        %v804 = vunpack.c.l.b16 %v796
        %v805 = vpack.c.b16 %v802, %v801
        %v806 = vpack.c.b16 %v804, %v803
        %v810 = vsel %vm555, %v792, 0
        %812 = vmatprep.subr.bf16.mxu0 0
        %813 = vmatpush1.bf16.msra.mxu0 %v805
        %814 = vmatprep.subr.bf16.mxu0 0
        %815 = vmatpush1.bf16.msra.mxu0 %v806
        %816 = vmatprep.subr.bf16.mxu0 0
        %817 = vmatpush1.bf16.msra.mxu0 0
        %818 = vmatprep.subr.bf16.mxu0 0
        %819 = vmatpush1.bf16.msra.mxu0 0
        %820 = vmatprep.subr.bf16.mxu0 0
        %821 = vmatpush1.bf16.msra.mxu0 0
        %822 = vmatprep.subr.bf16.mxu0 0
        %823 = vmatpush1.bf16.msra.mxu0 0
        %824 = vmatprep.subr.bf16.mxu0 0
        %825 = vmatpush1.bf16.msra.mxu0 0
        %826 = vmatprep.subr.bf16.mxu0 0
        %827 = vmatpush1.bf16.msra.mxu0 0
        %828 = vmatprep.subr.bf16.mxu0 0
        %829 = vmatpush1.bf16.msra.mxu0 0
        %830 = vmatprep.subr.bf16.mxu0 0
        %831 = vmatpush1.bf16.msra.mxu0 0
        %832 = vmatprep.subr.bf16.mxu0 0
        %833 = vmatpush1.bf16.msra.mxu0 0
        %834 = vmatprep.subr.bf16.mxu0 0
        %835 = vmatpush1.bf16.msra.mxu0 0
        %836 = vmatprep.subr.bf16.mxu0 0
        %837 = vmatpush1.bf16.msra.mxu0 0
        %838 = vmatprep.subr.bf16.mxu0 0
        %839 = vmatpush1.bf16.msra.mxu0 0
        %840 = vmatprep.subr.bf16.mxu0 0
        %841 = vmatpush1.bf16.msra.mxu0 0
        %842 = vmatprep.subr.bf16.mxu0 0
        %843 = vmatpush1.bf16.msra.mxu0 0
        %844 = vmatprep.mubr.bf16.mxu0 0
        %845 = vmatmul.mubr.bf16.gmra.mrb[0].mxu0 %v810
        %v846 = vpop.f32.mrb[0].mxu0
        %v847 = vadd.f32 0.0, %v846
        %v848 = vpop.f32.mrb[0].mxu0
        %v849 = vpop.f32.mrb[0].mxu0
        %v850 = vpop.f32.mrb[0].mxu0
        %851 = vdwg.mxu0
        %p852 = scmp.eq.s32.totalorder %s38, 0
        // Predicated region
        $region65: #{tpu_custom_call.1} parent=43 // pred_check
          %p853 = pneg %p852
        $region66: #{tpu_custom_call.1} parent=43 // pred_check_branch
          %855 = sbr.rel (%p853) target = $region68
        $region67: #{tpu_custom_call.1} parent=43 // pred_region
          %856 = vst.msk [vmem:[#allocation2] sm:$0xff] %vm492, 0.0
        $region68: #{tpu_custom_call.1} parent=43 // pred_fallthru
          _
        %v857 = vld [vmem:[#allocation2] sm:$0xff]
        %v858 = vadd.f32 %v857, %v847
        %859 = vst.msk [vmem:[#allocation2] sm:$0xff] %vm492, %v858
        %p860 = scmp.eq.s32.totalorder %s38, 1
        // Predicated region
        $region69: #{tpu_custom_call.1} parent=43 // pred_check
          %p861 = pneg %p860
        $region70: #{tpu_custom_call.1} parent=43 // pred_check_branch
          %863 = sbr.rel (%p861) target = $region72
        $region71: #{tpu_custom_call.1} parent=43 // pred_region
          %v864 = vld [vmem:[#allocation2] sm:$0xff]
          %865 = vst.msk [vmem:[%s442] sm:$0xff] %vm492, %v864
        $region72: #{tpu_custom_call.1} parent=43 // pred_fallthru
          _
        %s866 = sand.u32 %s194, 1
        %s867 = scalar_lea.sflag [#allocation5], %s866
        %s868 = sand.u32 %s194, 1
        %s869 = smul.addr %s868, 8
        %s870 = scalar_lea.vmem [#allocation12], %s869
        %s871 = sand.u32 %s33, 1
        %s872 = scalar_lea.sflag [#allocation14], %s871
        %s873 = sand.u32 %s222, 1
        %s874 = smul.addr %s873, 4
        %s875 = scalar_lea.vmem [#allocation13], %s874
        %s876 = sand.u32 %s33, 1
        %s877 = scalar_lea.sflag [#allocation14], %s876
        %s878 = sand.u32 %s250, 1
        %s879 = smul.addr %s878, 4
        %s880 = scalar_lea.vmem [#allocation15], %s879
        // Predicated region
        $region73: #{tpu_custom_call.1} parent=43 // pred_check
          %p881 = pneg %p204
        $region74: #{tpu_custom_call.1} parent=43 // pred_check_branch
          %883 = sbr.rel (%p881) target = $region76
        $region75: #{tpu_custom_call.1} parent=43 // pred_region
          %s885 = ssub.s32 128, 128
          %886 = vsyncadd %s867, %s885
          %s887 = smul.addr %s37, 128
          %s888 = scalar_lea.hbm %s6, %s887
          %s890 = sshll.u32 %s870, 4
          %s891 = int_to_ptr.vmem [resolvable:$true] %s890
          %893 = dma.vmem_to_hbm [thread:$0]  %s891, 128, %s888, %s867
        $region76: #{tpu_custom_call.1} parent=43 // pred_fallthru
          _
        // Predicated region
        $region77: #{tpu_custom_call.1} parent=43 // pred_check
          %p894 = pneg %p232
        $region78: #{tpu_custom_call.1} parent=43 // pred_check_branch
          %896 = sbr.rel (%p894) target = $region80
        $region79: #{tpu_custom_call.1} parent=43 // pred_region
          %s898 = ssub.s32 64, 64
          %899 = vsyncadd %s872, %s898
          %s900 = smul.addr %s37, 2
          %s901 = sadd.s32 %s38, %s900
          %s902 = smul.addr %s901, 64
          %s903 = scalar_lea.hbm %s7, %s902
          %s905 = sshll.u32 %s875, 4
          %s906 = int_to_ptr.vmem [resolvable:$true] %s905
          %908 = dma.vmem_to_hbm [thread:$0]  %s906, 64, %s903, %s872
        $region80: #{tpu_custom_call.1} parent=43 // pred_fallthru
          _
        // Predicated region
        $region81: #{tpu_custom_call.1} parent=43 // pred_check
          %p909 = pneg %p260
        $region82: #{tpu_custom_call.1} parent=43 // pred_check_branch
          %911 = sbr.rel (%p909) target = $region84
        $region83: #{tpu_custom_call.1} parent=43 // pred_region
          %s913 = ssub.s32 64, 64
          %914 = vsyncadd %s877, %s913
          %s915 = smul.addr %s37, 2
          %s916 = sadd.s32 %s38, %s915
          %s917 = smul.addr %s916, 64
          %s918 = scalar_lea.hbm %s8, %s917
          %s920 = sshll.u32 %s880, 4
          %s921 = int_to_ptr.vmem [resolvable:$true] %s920
          %923 = dma.vmem_to_hbm [thread:$0]  %s921, 64, %s918, %s877
        $region84: #{tpu_custom_call.1} parent=43 // pred_fallthru
          _
      $region44: #{tpu_custom_call.1} parent=5 // pred_fallthru
        _
      %p924 = scmp.le.s32.totalorder 2, %s28
      // Predicated region
      $region85: #{tpu_custom_call.1} parent=5 // pred_check
        %p925 = pneg %p924
      $region86: #{tpu_custom_call.1} parent=5 // pred_check_branch
        %927 = sbr.rel (%p925) target = $region88
      $region87: #{tpu_custom_call.1} parent=5 // pred_region
        %s928 = ssub.s32 %s28, 2
        // Predicated region
        $region89: #{tpu_custom_call.1} parent=87 // pred_check
          %p929 = pneg %p210
        $region90: #{tpu_custom_call.1} parent=87 // pred_check_branch
          %931 = sbr.rel (%p929) target = $region92
        $region91: #{tpu_custom_call.1} parent=87 // pred_region
          %s932 = sand.u32 %s195, 1
          %s933 = scalar_lea.sflag [#allocation5], %s932
          %s934 = sand.u32 %s195, 1
          %s935 = smul.addr %s934, 8
          %s936 = scalar_lea.vmem [#allocation12], %s935
          %937 = dma.done %s933, 128
        $region92: #{tpu_custom_call.1} parent=87 // pred_fallthru
          _
        // Predicated region
        $region93: #{tpu_custom_call.1} parent=87 // pred_check
          %p938 = pneg %p238
        $region94: #{tpu_custom_call.1} parent=87 // pred_check_branch
          %940 = sbr.rel (%p938) target = $region96
        $region95: #{tpu_custom_call.1} parent=87 // pred_region
          %s941 = sand.u32 %s34, 1
          %s942 = scalar_lea.sflag [#allocation14], %s941
          %s943 = sand.u32 %s223, 1
          %s944 = smul.addr %s943, 4
          %s945 = scalar_lea.vmem [#allocation13], %s944
          %946 = dma.done %s942, 64
        $region96: #{tpu_custom_call.1} parent=87 // pred_fallthru
          _
        // Predicated region
        $region97: #{tpu_custom_call.1} parent=87 // pred_check
          %p947 = pneg %p266
        $region98: #{tpu_custom_call.1} parent=87 // pred_check_branch
          %949 = sbr.rel (%p947) target = $region100
        $region99: #{tpu_custom_call.1} parent=87 // pred_region
          %s950 = sand.u32 %s34, 1
          %s951 = scalar_lea.sflag [#allocation14], %s950
          %s952 = sand.u32 %s251, 1
          %s953 = smul.addr %s952, 4
          %s954 = scalar_lea.vmem [#allocation15], %s953
          %955 = dma.done %s951, 64
        $region100: #{tpu_custom_call.1} parent=87 // pred_fallthru
          _
      $region88: #{tpu_custom_call.1} parent=5 // pred_fallthru
        _
    $region6: #{tpu_custom_call.1} parent=1 // loop_footer
      %s32 = sadd.s32 1, %s28
    $region7: #{tpu_custom_call.1} parent=1 // loop_footer_branch
      %27 = sbr.rel target = $region3
    $region8: #{tpu_custom_call.1} parent=1 // loop_exit
      _
    %956 = vsyncpa [#allocation4], 1
    %s957 = scalar_lea.sflag [#allocation4], 1
    %958 = vsyncpa %s957, 1
    %959 = vsyncpa [#allocation7], 1
    %s960 = scalar_lea.sflag [#allocation7], 1
    %961 = vsyncpa %s960, 1
    %962 = vsyncpa [#allocation10], 1
    %963 = vsyncpa [#allocation5], 1
    %s964 = scalar_lea.sflag [#allocation5], 1
    %965 = vsyncpa %s964, 1
    %966 = vsyncpa [#allocation14], 1
    %s967 = scalar_lea.sflag [#allocation14], 1
    %968 = vsyncpa %s967, 1

</llo_original>
